<compile_context>
chip_gen: v7x
topology: tpu7x:2x2x1
jax: 0.10.0
libtpu: 0.0.40
codegen_flags: <defaults>
</compile_context>

<pallas_src>
import functools

import jax
import jax.numpy as jnp
from jax import lax
from jax.experimental import pallas as pl
from jax.experimental.pallas import tpu as pltpu


def _round_up(x, m):
    return ((x + m - 1) // m) * m


def _make_vq_kernel(hw_total, tm, chunk, k):
    """Builds the per-tile VQ kernel (all shape params are static)."""
    needs_mask = (hw_total % tm) != 0
    n_chunks = tm // chunk

    def kernel(x_ref, ne_ref, esq_ref, et_ref,
               q_ref, idx_ref, counts_ref, sse_ref):
        # x_ref:      [D, tm]   lane-dense tile of inputs (columns = h*W + w)
        # ne_ref:     [K, D]    -2 * codebook (resident; constant block index)
        # esq_ref:    [K, 1]    per-code squared norms (resident)
        # et_ref:     [D, K]    transposed codebook (resident)
        # q_ref:      [D, tm]   quantized columns
        # idx_ref:    [1, tm]   nearest-code indices (lane-dense row)
        # counts_ref: [1, K]    per-tile code counts (partial)
        # sse_ref:    [1, 1]    per-tile sum of squared quantization errors
        j = pl.program_id(1)

        def body(c, carry):
            counts_acc, sse_acc = carry
            start = pl.multiple_of(c * chunk, chunk)

            # Per-chunk loads keep operands out of long live ranges.
            x_c = x_ref[:, pl.ds(start, chunk)].astype(jnp.float32)   # [D, chunk]
            ne = ne_ref[...].astype(jnp.float32)                      # [K, D]
            esq = esq_ref[...].astype(jnp.float32)                    # [K, 1]
            et = et_ref[...].astype(jnp.float32)                      # [D, K]

            # ||x - e||^2 up to the per-column constant x_sq:
            #   dist_p = -2 e.x + ||e||^2                            -> [K, chunk]
            dist_p = jnp.dot(ne, x_c, preferred_element_type=jnp.float32) + esq

            # argmin over the code (sublane) axis, first-occurrence tie-break.
            min_p = jnp.min(dist_p, axis=0, keepdims=True)            # [1, chunk]
            k_iota = lax.broadcasted_iota(jnp.int32, (k, chunk), 0)   # [K, chunk]
            idx = jnp.min(jnp.where(dist_p == min_p, k_iota, k),
                          axis=0, keepdims=True)                      # [1, chunk]

            # one-hot (transposed) and quantized columns: E^T @ onehot (full K).
            onehot_t = (k_iota == idx).astype(jnp.float32)            # [K, chunk]
            q_c = jnp.dot(et, onehot_t, preferred_element_type=jnp.float32)

            idx_ref[:, pl.ds(start, chunk)] = idx.astype(jnp.int32)
            q_ref[:, pl.ds(start, chunk)] = q_c.astype(q_ref.dtype)

            # per-column squared quantization error = selected min distance.
            x_sq = jnp.sum(x_c * x_c, axis=0, keepdims=True)          # [1, chunk]
            d2 = jnp.maximum(min_p + x_sq, 0.0)                       # [1, chunk]

            if needs_mask:
                col = lax.broadcasted_iota(jnp.int32, (1, chunk), 1)
                valid = (j * tm + start + col) < hw_total             # [1, chunk]
                onehot_t = jnp.where(valid, onehot_t, 0.0)
                d2 = jnp.where(valid, d2, 0.0)

            counts_acc = counts_acc + jnp.sum(onehot_t, axis=1)[None, :]
            sse_acc = sse_acc + jnp.sum(d2)
            return counts_acc, sse_acc

        counts, sse = lax.fori_loop(
            0, n_chunks, body,
            (jnp.zeros((1, k), jnp.float32), jnp.zeros((), jnp.float32)))
        counts_ref[...] = counts
        sse_ref[...] = sse.reshape(1, 1)

    return kernel


def vq_ema_forward(x_nchw, embedding, commitment_cost, *, tm=512, chunk=128):
    """Forward pass of VectorQuantizerEMA (eval-mode output semantics).

    Args:
      x_nchw:    [B, D, H, W] inputs (PyTorch conv layout).
      embedding: [K, D] codebook.
    Returns:
      (loss, quantized_nchw, perplexity, encoding_indices[N, 1])
    """
    B, D, H, W = x_nchw.shape
    K = embedding.shape[0]
    HW = H * W
    N = B * HW

    assert chunk % 128 == 0, "chunk must be a multiple of 128 (lane width)"
    tm = max(128, min(_round_up(tm, 128), _round_up(HW, 128)))
    if tm % chunk != 0:
        chunk = 128
    num_j = pl.cdiv(HW, tm)
    hw_pad = num_j * tm

    # Free reshape: NCHW -> [B, D, HW]; column (h*W + w) of batch b corresponds
    # exactly to row (b, h, w) of the reference NHWC flattening.
    x_bdn = x_nchw.reshape(B, D, HW).astype(jnp.float32)

    e_f32 = embedding.astype(jnp.float32)                  # [K, D]
    neg2e = (-2.0) * e_f32                                 # [K, D]
    e_sq = jnp.sum(e_f32 * e_f32, axis=1, keepdims=True)   # [K, 1]
    e_t = jnp.transpose(e_f32)                             # [D, K]

    kernel = _make_vq_kernel(HW, tm, chunk, K)

    q_bdn, idx, counts, sse = pl.pallas_call(
        kernel,
        out_shape=(
            jax.ShapeDtypeStruct((B, D, hw_pad), jnp.float32),
            jax.ShapeDtypeStruct((B, num_j, 1, tm), jnp.int32),
            jax.ShapeDtypeStruct((B, num_j, 1, K), jnp.float32),
            jax.ShapeDtypeStruct((B, num_j, 1, 1), jnp.float32),
        ),
        grid_spec=pltpu.PrefetchScalarGridSpec(
            num_scalar_prefetch=0,
            grid=(B, num_j),
            in_specs=[
                pl.BlockSpec((None, D, tm), lambda b, j: (b, 0, j)),   # x tile
                pl.BlockSpec((K, D), lambda b, j: (0, 0)),             # -2 E
                pl.BlockSpec((K, 1), lambda b, j: (0, 0)),             # ||E||^2
                pl.BlockSpec((D, K), lambda b, j: (0, 0)),             # E^T
            ],
            out_specs=[
                pl.BlockSpec((None, D, tm), lambda b, j: (b, 0, j)),         # q
                pl.BlockSpec((None, None, 1, tm), lambda b, j: (b, j, 0, 0)),  # idx
                pl.BlockSpec((None, None, 1, K), lambda b, j: (b, j, 0, 0)),   # counts
                pl.BlockSpec((None, None, 1, 1), lambda b, j: (b, j, 0, 0)),   # sse
            ],
        ),
        compiler_params=pltpu.CompilerParams(
            dimension_semantics=("parallel", "parallel")),
    )(x_bdn, neg2e, e_sq, e_t)

    # e_latent_loss = mean((quantized.detach() - inputs)^2); loss = beta * it.
    e_latent_loss = jnp.sum(sse) / jnp.float32(N * D)
    loss = jnp.float32(commitment_cost) * e_latent_loss

    # [B, D, HW] -> NCHW (free), plus straight-through estimator (value == q).
    if hw_pad != HW:
        q_bdn = q_bdn[:, :, :HW]
    q_nchw = q_bdn.reshape(B, D, H, W)
    x_f32 = x_nchw.astype(jnp.float32)
    quantized = x_f32 + lax.stop_gradient(q_nchw - x_f32)

    idx_flat = idx.reshape(B, hw_pad)
    if hw_pad != HW:
        idx_flat = idx_flat[:, :HW]
    encoding_indices = idx_flat.reshape(-1)[:, None]        # [N, 1] int32

    avg_probs = jnp.sum(counts, axis=(0, 1, 2)) / jnp.float32(N)
    perplexity = jnp.exp(-jnp.sum(avg_probs * jnp.log(avg_probs + 1e-10)))

    return loss, quantized, perplexity, encoding_indices


if __name__ == "__main__":
    # Module hyper-parameters (deterministic, synthetic init).
    num_embeddings = 128     # K
    embedding_dim = 8        # D
    commitment_cost = 0.25
    # decay / epsilon belong to the (unimplemented) EMA state update.

    B, H, W = 2, 16, 16      # input is NCHW: [B, D, H, W]
    N = B * H * W

    key = jax.random.PRNGKey(0)
    k_x, k_emb = jax.random.split(key)
    x = jax.random.normal(k_x, (B, embedding_dim, H, W), dtype=jnp.float32)
    embedding = jax.random.normal(k_emb, (num_embeddings, embedding_dim),
                                  dtype=jnp.float32)

    fwd = jax.jit(functools.partial(vq_ema_forward,
                                    commitment_cost=commitment_cost))
    loss, quantized, perplexity, indices = fwd(x, embedding)
    jax.block_until_ready((loss, quantized, perplexity, indices))

    # ---- Pure-JAX reference checks (tie-robust) ----
    x_nhwc = jnp.transpose(x, (0, 2, 3, 1)).reshape(N, embedding_dim)
    d_ref = (jnp.sum(x_nhwc ** 2, 1, keepdims=True)
             + jnp.sum(embedding ** 2, 1)
             - 2.0 * jnp.matmul(x_nhwc, embedding.T,
                                precision=lax.Precision.HIGHEST))
    idx_ref = jnp.argmin(d_ref, axis=1)
    idx_k = indices[:, 0]

    # kernel-selected codes must be (numerically) nearest codes
    d_sel = jnp.take_along_axis(d_ref, idx_k[:, None], axis=1)[:, 0]
    d_min = jnp.min(d_ref, axis=1)
    assert jnp.all(d_sel <= d_min + 1e-4)
    assert jnp.mean((idx_k == idx_ref).astype(jnp.float32)) >= 0.99

    # quantized output equals the codebook entries at the chosen indices (NCHW)
    q_chk = jnp.transpose(
        embedding[idx_k].reshape(B, H, W, embedding_dim), (0, 3, 1, 2))
    assert jnp.allclose(quantized, q_chk, atol=1e-5)

    # loss and perplexity
    loss_chk = commitment_cost * jnp.mean((q_chk - x) ** 2)
    assert jnp.allclose(loss, loss_chk, atol=1e-4, rtol=1e-4)
    probs_chk = jnp.bincount(idx_k, length=num_embeddings) / N
    perp_chk = jnp.exp(-jnp.sum(probs_chk * jnp.log(probs_chk + 1e-10)))
    assert jnp.allclose(perplexity, perp_chk, atol=1e-4, rtol=1e-4)

    print("KERNEL_OK")
</pallas_src>

<mosaic_0001>
module attributes {stable_mosaic.version = 11 : i64} {
  func.func @kernel(%arg0: i32, %arg1: i32, %arg2: memref<1x8x256xf32, #tpu.memory_space<vmem>>, %arg3: memref<128x8xf32, #tpu.memory_space<vmem>>, %arg4: memref<128x1xf32, #tpu.memory_space<vmem>>, %arg5: memref<8x128xf32, #tpu.memory_space<vmem>>, %arg6: memref<1x8x256xf32, #tpu.memory_space<vmem>>, %arg7: memref<1x1x1x256xi32, #tpu.memory_space<vmem>>, %arg8: memref<1x1x1x128xf32, #tpu.memory_space<vmem>>, %arg9: memref<1x1x1x1xf32, #tpu.memory_space<vmem>>) attributes {dimension_semantics = [#tpu.dimension_semantics<parallel>, #tpu.dimension_semantics<parallel>], iteration_bounds = array<i64: 2, 1>, scalar_prefetch = 0 : i64, scratch_operands = 0 : i64, tpu.core_type = #tpu.core_type<tc>, window_params = [{transform_indices = @transform_0, window_bounds = array<i64: 1, 8, 256>}, {pipeline_mode = #tpu.pipeline_mode<synchronous>, transform_indices = @transform_1, window_bounds = array<i64: 128, 8>}, {pipeline_mode = #tpu.pipeline_mode<synchronous>, transform_indices = @transform_2, window_bounds = array<i64: 128, 1>}, {pipeline_mode = #tpu.pipeline_mode<synchronous>, transform_indices = @transform_3, window_bounds = array<i64: 8, 128>}, {transform_indices = @transform_4, window_bounds = array<i64: 1, 8, 256>}, {transform_indices = @transform_5, window_bounds = array<i64: 1, 1, 1, 256>}, {transform_indices = @transform_6, window_bounds = array<i64: 1, 1, 1, 128>}, {transform_indices = @transform_7, window_bounds = array<i64: 1, 1, 1, 1>}]} {
    %cst = arith.constant 0.000000e+00 : f32
    %0 = vector.broadcast %cst : f32 to vector<1x128xf32>
    %cst_0 = arith.constant 0.000000e+00 : f32
    %c0_i32 = arith.constant 0 : i32
    %c2_i32 = arith.constant 2 : i32
    %1 = arith.addi %c0_i32, %c2_i32 : i32
    %c1_i32 = arith.constant 1 : i32
    %2:2 = scf.for %arg10 = %c0_i32 to %1 step %c1_i32 iter_args(%arg11 = %0, %arg12 = %cst_0) -> (vector<1x128xf32>, f32)  : i32 {
      %c128_i32 = arith.constant 128 : i32
      %10 = arith.muli %arg10, %c128_i32 : i32
      %11 = tpu.assume_multiple %10, 128 : i32
      %c0_9 = arith.constant 0 : index
      %c0_10 = arith.constant 0 : index
      %12 = arith.index_cast %11 : i32 to index
      %13 = vector.load %arg2[%c0_9, %c0_10, %12] : memref<1x8x256xf32, #tpu.memory_space<vmem>>, vector<1x8x128xf32>
      %14 = vector.shape_cast %13 : vector<1x8x128xf32> to vector<8x128xf32>
      %c0_11 = arith.constant 0 : index
      %c0_12 = arith.constant 0 : index
      %15 = vector.load %arg3[%c0_11, %c0_12] : memref<128x8xf32, #tpu.memory_space<vmem>>, vector<128x8xf32>
      %c0_13 = arith.constant 0 : index
      %c0_14 = arith.constant 0 : index
      %16 = vector.load %arg4[%c0_13, %c0_14] : memref<128x1xf32, #tpu.memory_space<vmem>>, vector<128x1xf32>
      %c0_15 = arith.constant 0 : index
      %c0_16 = arith.constant 0 : index
      %17 = vector.load %arg5[%c0_15, %c0_16] : memref<8x128xf32, #tpu.memory_space<vmem>>, vector<8x128xf32>
      %cst_17 = arith.constant dense<0.000000e+00> : vector<128x128xf32>
      %18 = tpu.matmul %15, %14, %cst_17 {dimension_numbers = #tpu.dot_dimension_numbers<[1], [0], [0], [1], [0, 0, 1, 1], [], []>} : vector<128x8xf32>, vector<8x128xf32>, vector<128x128xf32> -> vector<128x128xf32>
      %19 = vector.broadcast %16 : vector<128x1xf32> to vector<128x128xf32>
      %20 = arith.addf %18, %19 : vector<128x128xf32>
      %cst_18 = arith.constant dense<0x7F800000> : vector<128xf32>
      %21 = vector.multi_reduction <minimumf>, %20, %cst_18 [0] : vector<128x128xf32> to vector<128xf32>
      %22 = vector.shape_cast %21 : vector<128xf32> to vector<1x128xf32>
      %23 = tpu.iota {dimensions = array<i32: 0>} : vector<128x128xi32>
      %24 = vector.broadcast %22 : vector<1x128xf32> to vector<128x128xf32>
      %25 = arith.cmpf oeq, %20, %24 : vector<128x128xf32>
      %c128_i32_19 = arith.constant 128 : i32
      %26 = vector.broadcast %c128_i32_19 : i32 to vector<128x128xi32>
      %27 = arith.select %25, %23, %26 : vector<128x128xi1>, vector<128x128xi32>
      %cst_20 = arith.constant dense<2147483647> : vector<128xi32>
      %28 = vector.multi_reduction <minsi>, %27, %cst_20 [0] : vector<128x128xi32> to vector<128xi32>
      %29 = vector.shape_cast %28 : vector<128xi32> to vector<1x128xi32>
      %30 = vector.broadcast %29 : vector<1x128xi32> to vector<128x128xi32>
      %31 = arith.cmpi eq, %23, %30 : vector<128x128xi32>
      %32 = arith.extui %31 : vector<128x128xi1> to vector<128x128xi32>
      %33 = arith.sitofp %32 : vector<128x128xi32> to vector<128x128xf32>
      %cst_21 = arith.constant dense<0.000000e+00> : vector<8x128xf32>
      %34 = tpu.matmul %17, %33, %cst_21 {dimension_numbers = #tpu.dot_dimension_numbers<[1], [0], [0], [1], [0, 0, 1, 1], [], []>} : vector<8x128xf32>, vector<128x128xf32>, vector<8x128xf32> -> vector<8x128xf32>
      %c0_22 = arith.constant 0 : index
      %c0_23 = arith.constant 0 : index
      %c0_24 = arith.constant 0 : index
      %35 = arith.index_cast %11 : i32 to index
      %36 = vector.load %arg7[%c0_22, %c0_23, %c0_24, %35] : memref<1x1x1x256xi32, #tpu.memory_space<vmem>>, vector<1x1x1x128xi32>
      %37 = vector.shape_cast %36 : vector<1x1x1x128xi32> to vector<1x128xi32>
      %38 = vector.shape_cast %29 : vector<1x128xi32> to vector<1x1x1x128xi32>
      tpu.vector_store %arg7[%c0_22, %c0_23, %c0_24, %35], %38 {strides = array<i32>} : memref<1x1x1x256xi32, #tpu.memory_space<vmem>>, vector<1x1x1x128xi32>,
      %c0_25 = arith.constant 0 : index
      %c0_26 = arith.constant 0 : index
      %39 = arith.index_cast %11 : i32 to index
      %40 = vector.load %arg6[%c0_25, %c0_26, %39] : memref<1x8x256xf32, #tpu.memory_space<vmem>>, vector<1x8x128xf32>
      %41 = vector.shape_cast %40 : vector<1x8x128xf32> to vector<8x128xf32>
      %42 = vector.shape_cast %34 : vector<8x128xf32> to vector<1x8x128xf32>
      tpu.vector_store %arg6[%c0_25, %c0_26, %39], %42 {strides = array<i32>} : memref<1x8x256xf32, #tpu.memory_space<vmem>>, vector<1x8x128xf32>,
      %43 = arith.mulf %14, %14 : vector<8x128xf32>
      %cst_27 = arith.constant dense<0.000000e+00> : vector<128xf32>
      %44 = vector.multi_reduction <add>, %43, %cst_27 [0] : vector<8x128xf32> to vector<128xf32>
      %45 = vector.shape_cast %44 : vector<128xf32> to vector<1x128xf32>
      %46 = arith.addf %22, %45 : vector<1x128xf32>
      %cst_28 = arith.constant 0.000000e+00 : f32
      %47 = vector.broadcast %cst_28 : f32 to vector<1x128xf32>
      %48 = arith.maximumf %46, %47 : vector<1x128xf32>
      %cst_29 = arith.constant dense<0.000000e+00> : vector<128xf32>
      %49 = vector.multi_reduction <add>, %33, %cst_29 [1] : vector<128x128xf32> to vector<128xf32>
      %50 = vector.shape_cast %49 : vector<128xf32> to vector<1x128xf32>
      %51 = arith.addf %arg11, %50 : vector<1x128xf32>
      %52 = vector.shape_cast %48 : vector<1x128xf32> to vector<1x1x128xf32>
      %cst_30 = arith.constant dense<0.000000e+00> : vector<1xf32>
      %53 = vector.multi_reduction <add>, %52, %cst_30 [1, 2] : vector<1x1x128xf32> to vector<1xf32>
      %54 = vector.shape_cast %53 : vector<1xf32> to vector<1x1x1xf32>
      %55 = vector.extract %54[0, 0, 0] : f32 from vector<1x1x1xf32>
      %56 = arith.addf %arg12, %55 : f32
      scf.yield %51, %56 : vector<1x128xf32>, f32
    }
    %c2_i32_1 = arith.constant 2 : i32
    %c0 = arith.constant 0 : index
    %c0_2 = arith.constant 0 : index
    %c0_3 = arith.constant 0 : index
    %c0_4 = arith.constant 0 : index
    %3 = vector.load %arg8[%c0, %c0_2, %c0_3, %c0_4] : memref<1x1x1x128xf32, #tpu.memory_space<vmem>>, vector<1x1x1x128xf32>
    %4 = vector.shape_cast %3 : vector<1x1x1x128xf32> to vector<1x128xf32>
    %5 = vector.shape_cast %2#0 : vector<1x128xf32> to vector<1x1x1x128xf32>
    tpu.vector_store %arg8[%c0, %c0_2, %c0_3, %c0_4], %5 {strides = array<i32>} : memref<1x1x1x128xf32, #tpu.memory_space<vmem>>, vector<1x1x1x128xf32>,
    %6 = vector.broadcast %2#1 : f32 to vector<1x1xf32>
    %c0_5 = arith.constant 0 : index
    %c0_6 = arith.constant 0 : index
    %c0_7 = arith.constant 0 : index
    %c0_8 = arith.constant 0 : index
    %7 = vector.load %arg9[%c0_5, %c0_6, %c0_7, %c0_8] : memref<1x1x1x1xf32, #tpu.memory_space<vmem>>, vector<1x1x1x1xf32>
    %8 = vector.shape_cast %7 : vector<1x1x1x1xf32> to vector<1x1xf32>
    %9 = vector.shape_cast %6 : vector<1x1xf32> to vector<1x1x1x1xf32>
    tpu.vector_store %arg9[%c0_5, %c0_6, %c0_7, %c0_8], %9 {strides = array<i32>} : memref<1x1x1x1xf32, #tpu.memory_space<vmem>>, vector<1x1x1x1xf32>,
    return
  }
  func.func @transform_0(%arg0: i32, %arg1: i32) -> (i32, i32, i32) {
    %c0_i32 = arith.constant 0 : i32
    %c0_i32_0 = arith.constant 0 : i32
    return %arg0, %c0_i32, %arg1 : i32, i32, i32
  }
  func.func @transform_1(%arg0: i32, %arg1: i32) -> (i32, i32) {
    %c0_i32 = arith.constant 0 : i32
    %c0_i32_0 = arith.constant 0 : i32
    %c0_i32_1 = arith.constant 0 : i32
    return %c0_i32, %c0_i32_0 : i32, i32
  }
  func.func @transform_2(%arg0: i32, %arg1: i32) -> (i32, i32) {
    %c0_i32 = arith.constant 0 : i32
    %c0_i32_0 = arith.constant 0 : i32
    %c0_i32_1 = arith.constant 0 : i32
    return %c0_i32, %c0_i32_0 : i32, i32
  }
  func.func @transform_3(%arg0: i32, %arg1: i32) -> (i32, i32) {
    %c0_i32 = arith.constant 0 : i32
    %c0_i32_0 = arith.constant 0 : i32
    %c0_i32_1 = arith.constant 0 : i32
    return %c0_i32, %c0_i32_0 : i32, i32
  }
  func.func @transform_4(%arg0: i32, %arg1: i32) -> (i32, i32, i32) {
    %c0_i32 = arith.constant 0 : i32
    %c0_i32_0 = arith.constant 0 : i32
    return %arg0, %c0_i32, %arg1 : i32, i32, i32
  }
  func.func @transform_5(%arg0: i32, %arg1: i32) -> (i32, i32, i32, i32) {
    %c0_i32 = arith.constant 0 : i32
    %c0_i32_0 = arith.constant 0 : i32
    %c0_i32_1 = arith.constant 0 : i32
    return %arg0, %arg1, %c0_i32, %c0_i32_0 : i32, i32, i32, i32
  }
  func.func @transform_6(%arg0: i32, %arg1: i32) -> (i32, i32, i32, i32) {
    %c0_i32 = arith.constant 0 : i32
    %c0_i32_0 = arith.constant 0 : i32
    %c0_i32_1 = arith.constant 0 : i32
    return %arg0, %arg1, %c0_i32, %c0_i32_0 : i32, i32, i32, i32
  }
  func.func @transform_7(%arg0: i32, %arg1: i32) -> (i32, i32, i32, i32) {
    %c0_i32 = arith.constant 0 : i32
    %c0_i32_0 = arith.constant 0 : i32
    %c0_i32_1 = arith.constant 0 : i32
    return %arg0, %arg1, %c0_i32, %c0_i32_0 : i32, i32, i32, i32
  }
}

</mosaic_0001>

<llo_original>
// kernel: vq_ema_forward.1
$region0: #{vq_ema_forward.1}
  #allocation0 [shape = 'u32[]', space=smem, size = 0x4, offset = 0x4, fixed_abs, tag = 'smem constant byte address 0x4 - core index']
  #allocation1 [shape = 'u32[144,128]{1,0:T(1,128)}', space=vmem, size = 0x12000, scoped, tag = 'internal scratch']
  %s0 = inlined_call_operand.vmem [shape: f32[2,8,256], index: 0, kind: input, shape index: {}]
  %s1 = inlined_call_operand.vmem [shape: f32[128,8], index: 1, kind: input, shape index: {}]
  %s2 = inlined_call_operand.vmem [shape: f32[128,1], index: 2, kind: input, shape index: {}]
  %s3 = inlined_call_operand.vmem [shape: f32[8,128], index: 3, kind: input, shape index: {}]
  %s4 = inlined_call_operand.vmem [shape: f32[2,8,256], index: 4, kind: output, shape index: {0}]
  %s5 = inlined_call_operand.hbm [shape: s32[2,1,1,256], index: 5, kind: output, shape index: {1}]
  %s6 = inlined_call_operand.vmem [shape: f32[2,1,1,128], index: 6, kind: output, shape index: {2}]
  %s7 = inlined_call_operand.vmem [shape: f32[2,1,1,1], index: 7, kind: output, shape index: {3}]
  %8 = xla_tuple %s4, %s5, %s6, %s7
  %s9 = sld [smem:[#allocation0]]
  $region80: #{vq_ema_forward.1} parent=0
    _
  %s11 = ssub.s32 1, %s9
  %s12 = scalar_select 0, %s11, %s9
  $region1: #{vq_ema_forward.1} parent=0
    #allocation2 [shape = 'u8[2048]{0}', space=vmem, size = 0x800, scoped, tag = 'output window, operand 1']
    #allocation3 [shape = 's32[2]{0}', space=sflag, size = 0x8, scoped, tag = 'scoped memory for vq_ema_forward.1']
    %13 = vsyncpa [#allocation3], 0
    %s14 = scalar_lea.sflag [#allocation3], 1
    %15 = vsyncpa %s14, 0
    loop: start=0, step=1, limit=4
    $region2: #{vq_ema_forward.1} parent=1 // loop_pre_header
      _
    $region3: #{vq_ema_forward.1} parent=1 // loop_header
      %s17 = sphi 0, %s21
      %p18 = scmp.ge.s32.totalorder %s17, 4
      %s24 = sphi 0, %s36
      %s25 = sphi 0, %s32
      %s26 = sphi 0, %s24
      %s27 = sphi 0, %s25
      %s28 = sphi 0, %s26
      %s29 = sphi 0, %s27
      %s41 = sphi 0, %s43
      %s44 = sphi 0, %s41
      %s45 = sphi 0, %s44
      %s61 = sphi 0, %s45
      %s65 = sphi 0, %s65
      %s67 = sphi 0, %s65
      %s68 = sphi 0, %s67
      %s82 = sphi 0, %s68
      %s86 = sphi 0, %s86
      %s88 = sphi 0, %s86
      %s89 = sphi 0, %s88
      %s103 = sphi 0, %s89
      %s107 = sphi 0, %s107
      %s109 = sphi 0, %s107
      %s110 = sphi 0, %s109
      %s124 = sphi 0, %s110
      %s132 = sphi 0, %s134
      %s135 = sphi 0, %s132
      %s136 = sphi 0, %s135
      %s152 = sphi 0, %s136
      %s160 = sphi 0, %s162
      %s163 = sphi 0, %s160
      %s164 = sphi 0, %s163
      %s180 = sphi 0, %s164
      %s188 = sphi 0, %s190
      %s191 = sphi 0, %s188
      %s192 = sphi 0, %s191
      %s208 = sphi 0, %s192
      %s216 = sphi 0, %s218
      %s219 = sphi 0, %s216
      %s220 = sphi 0, %s219
      %s236 = sphi 0, %s220
    $region4: #{vq_ema_forward.1} parent=1 // loop_header_branch
      %20 = sbr.rel (%p18) target = $region8
    $region5: #{vq_ema_forward.1} parent=1 // loop_body
      %s22 = ssub.s32 %s17, 1
      %s23 = ssub.s32 %s17, 2
      %s30 = sadd.s32 1, %s25
      %p31 = scmp.ge.s32.totalorder %s30, 1
      %s32 = scalar_select %p31, 0, %s30
      %s33 = sadd.s32 1, %s24
      %s34 = scalar_select %p31, %s33, %s24
      %p35 = scmp.ge.s32.totalorder %s34, 2
      %s36 = scalar_select %p35, 0, %s34
      %s37 = ssub.s32 %s24, %s36
      %s38 = ssub.s32 %s25, %s32
      %s39 = sor.u32 %s37, %s38
      %p40 = scmp.eq.s32.totalorder %s39, 0
      %s42 = sadd.s32 %s41, 1
      %s43 = scalar_select %p40, %s41, %s42
      %p46 = pneg %p40
      %p47 = scmp.eq.s32.totalorder %s17, 1
      %p48 = por %p46, %p47
      %p49 = scmp.ne.s32.totalorder %s41, %s44
      %p50 = scmp.eq.s32.totalorder %s17, 0
      %p51 = por %p49, %p50
      %p52 = scmp.ne.s32.totalorder %s41, %s44
      %p53 = scmp.eq.s32.totalorder %s22, 1
      %p54 = por %p52, %p53
      %p55 = scmp.ne.s32.totalorder %s44, %s45
      %p56 = scmp.eq.s32.totalorder %s22, 0
      %p57 = por %p55, %p56
      %p58 = scmp.ne.s32.totalorder %s44, %s45
      %p59 = scmp.eq.s32.totalorder %s23, 1
      %p60 = por %p58, %p59
      %p62 = scmp.ne.s32.totalorder %s45, %s61
      %p63 = scmp.eq.s32.totalorder %s23, 0
      %p64 = por %p62, %p63
      %s66 = sadd.s32 %s65, 1
      %p69 = scmp.eq.s32.totalorder %s17, 1
      %p70 = scmp.ne.s32.totalorder %s65, %s67
      %p71 = scmp.eq.s32.totalorder %s17, 0
      %p72 = por %p70, %p71
      %p73 = scmp.ne.s32.totalorder %s65, %s67
      %p74 = scmp.eq.s32.totalorder %s22, 1
      %p75 = por %p73, %p74
      %p76 = scmp.ne.s32.totalorder %s67, %s68
      %p77 = scmp.eq.s32.totalorder %s22, 0
      %p78 = por %p76, %p77
      %p79 = scmp.ne.s32.totalorder %s67, %s68
      %p80 = scmp.eq.s32.totalorder %s23, 1
      %p81 = por %p79, %p80
      %p83 = scmp.ne.s32.totalorder %s68, %s82
      %p84 = scmp.eq.s32.totalorder %s23, 0
      %p85 = por %p83, %p84
      %s87 = sadd.s32 %s86, 1
      %p90 = scmp.eq.s32.totalorder %s17, 1
      %p91 = scmp.ne.s32.totalorder %s86, %s88
      %p92 = scmp.eq.s32.totalorder %s17, 0
      %p93 = por %p91, %p92
      %p94 = scmp.ne.s32.totalorder %s86, %s88
      %p95 = scmp.eq.s32.totalorder %s22, 1
      %p96 = por %p94, %p95
      %p97 = scmp.ne.s32.totalorder %s88, %s89
      %p98 = scmp.eq.s32.totalorder %s22, 0
      %p99 = por %p97, %p98
      %p100 = scmp.ne.s32.totalorder %s88, %s89
      %p101 = scmp.eq.s32.totalorder %s23, 1
      %p102 = por %p100, %p101
      %p104 = scmp.ne.s32.totalorder %s89, %s103
      %p105 = scmp.eq.s32.totalorder %s23, 0
      %p106 = por %p104, %p105
      %s108 = sadd.s32 %s107, 1
      %p111 = scmp.eq.s32.totalorder %s17, 1
      %p112 = scmp.ne.s32.totalorder %s107, %s109
      %p113 = scmp.eq.s32.totalorder %s17, 0
      %p114 = por %p112, %p113
      %p115 = scmp.ne.s32.totalorder %s107, %s109
      %p116 = scmp.eq.s32.totalorder %s22, 1
      %p117 = por %p115, %p116
      %p118 = scmp.ne.s32.totalorder %s109, %s110
      %p119 = scmp.eq.s32.totalorder %s22, 0
      %p120 = por %p118, %p119
      %p121 = scmp.ne.s32.totalorder %s109, %s110
      %p122 = scmp.eq.s32.totalorder %s23, 1
      %p123 = por %p121, %p122
      %p125 = scmp.ne.s32.totalorder %s110, %s124
      %p126 = scmp.eq.s32.totalorder %s23, 0
      %p127 = por %p125, %p126
      %s128 = ssub.s32 %s24, %s36
      %s129 = ssub.s32 %s25, %s32
      %s130 = sor.u32 %s128, %s129
      %p131 = scmp.eq.s32.totalorder %s130, 0
      %s133 = sadd.s32 %s132, 1
      %s134 = scalar_select %p131, %s132, %s133
      %p137 = pneg %p131
      %p138 = scmp.eq.s32.totalorder %s17, 1
      %p139 = por %p137, %p138
      %p140 = scmp.ne.s32.totalorder %s132, %s135
      %p141 = scmp.eq.s32.totalorder %s17, 0
      %p142 = por %p140, %p141
      %p143 = scmp.ne.s32.totalorder %s132, %s135
      %p144 = scmp.eq.s32.totalorder %s22, 1
      %p145 = por %p143, %p144
      %p146 = scmp.ne.s32.totalorder %s135, %s136
      %p147 = scmp.eq.s32.totalorder %s22, 0
      %p148 = por %p146, %p147
      %p149 = scmp.ne.s32.totalorder %s135, %s136
      %p150 = scmp.eq.s32.totalorder %s23, 1
      %p151 = por %p149, %p150
      %p153 = scmp.ne.s32.totalorder %s136, %s152
      %p154 = scmp.eq.s32.totalorder %s23, 0
      %p155 = por %p153, %p154
      %s156 = ssub.s32 %s24, %s36
      %s157 = ssub.s32 %s25, %s32
      %s158 = sor.u32 %s156, %s157
      %p159 = scmp.eq.s32.totalorder %s158, 0
      %s161 = sadd.s32 %s160, 1
      %s162 = scalar_select %p159, %s160, %s161
      %p165 = pneg %p159
      %p166 = scmp.eq.s32.totalorder %s17, 1
      %p167 = por %p165, %p166
      %p168 = scmp.ne.s32.totalorder %s160, %s163
      %p169 = scmp.eq.s32.totalorder %s17, 0
      %p170 = por %p168, %p169
      %p171 = scmp.ne.s32.totalorder %s160, %s163
      %p172 = scmp.eq.s32.totalorder %s22, 1
      %p173 = por %p171, %p172
      %p174 = scmp.ne.s32.totalorder %s163, %s164
      %p175 = scmp.eq.s32.totalorder %s22, 0
      %p176 = por %p174, %p175
      %p177 = scmp.ne.s32.totalorder %s163, %s164
      %p178 = scmp.eq.s32.totalorder %s23, 1
      %p179 = por %p177, %p178
      %p181 = scmp.ne.s32.totalorder %s164, %s180
      %p182 = scmp.eq.s32.totalorder %s23, 0
      %p183 = por %p181, %p182
      %s184 = ssub.s32 %s24, %s36
      %s185 = ssub.s32 %s25, %s32
      %s186 = sor.u32 %s184, %s185
      %p187 = scmp.eq.s32.totalorder %s186, 0
      %s189 = sadd.s32 %s188, 1
      %s190 = scalar_select %p187, %s188, %s189
      %p193 = pneg %p187
      %p194 = scmp.eq.s32.totalorder %s17, 1
      %p195 = por %p193, %p194
      %p196 = scmp.ne.s32.totalorder %s188, %s191
      %p197 = scmp.eq.s32.totalorder %s17, 0
      %p198 = por %p196, %p197
      %p199 = scmp.ne.s32.totalorder %s188, %s191
      %p200 = scmp.eq.s32.totalorder %s22, 1
      %p201 = por %p199, %p200
      %p202 = scmp.ne.s32.totalorder %s191, %s192
      %p203 = scmp.eq.s32.totalorder %s22, 0
      %p204 = por %p202, %p203
      %p205 = scmp.ne.s32.totalorder %s191, %s192
      %p206 = scmp.eq.s32.totalorder %s23, 1
      %p207 = por %p205, %p206
      %p209 = scmp.ne.s32.totalorder %s192, %s208
      %p210 = scmp.eq.s32.totalorder %s23, 0
      %p211 = por %p209, %p210
      %s212 = ssub.s32 %s24, %s36
      %s213 = ssub.s32 %s25, %s32
      %s214 = sor.u32 %s212, %s213
      %p215 = scmp.eq.s32.totalorder %s214, 0
      %s217 = sadd.s32 %s216, 1
      %s218 = scalar_select %p215, %s216, %s217
      %p221 = pneg %p215
      %p222 = scmp.eq.s32.totalorder %s17, 1
      %p223 = por %p221, %p222
      %p224 = scmp.ne.s32.totalorder %s216, %s219
      %p225 = scmp.eq.s32.totalorder %s17, 0
      %p226 = por %p224, %p225
      %p227 = scmp.ne.s32.totalorder %s216, %s219
      %p228 = scmp.eq.s32.totalorder %s22, 1
      %p229 = por %p227, %p228
      %p230 = scmp.ne.s32.totalorder %s219, %s220
      %p231 = scmp.eq.s32.totalorder %s22, 0
      %p232 = por %p230, %p231
      %p233 = scmp.ne.s32.totalorder %s219, %s220
      %p234 = scmp.eq.s32.totalorder %s23, 1
      %p235 = por %p233, %p234
      %p237 = scmp.ne.s32.totalorder %s220, %s236
      %p238 = scmp.eq.s32.totalorder %s23, 0
      %p239 = por %p237, %p238
      %p240 = scmp.le.s32.totalorder 1, %s17
      %p241 = scmp.lt.s32.totalorder %s17, 3
      %p242 = pnand %p240, %p241
      %p243 = pneg %p242
      // Predicated region
      $region9: #{vq_ema_forward.1} parent=5 // pred_check
        _
      $region10: #{vq_ema_forward.1} parent=5 // pred_check_branch
        %245 = sbr.rel (%p242) target = $region12
      $region11: #{vq_ema_forward.1} parent=5 // pred_region
        %s246 = ssub.s32 %s17, 1
        // Predicated region
        $region13: #{vq_ema_forward.1} parent=11 // pred_check
          %p247 = pneg %p78
        $region14: #{vq_ema_forward.1} parent=11 // pred_check_branch
          %249 = sbr.rel (%p247) target = $region16
        $region15: #{vq_ema_forward.1} parent=11 // pred_region
          _
        $region16: #{vq_ema_forward.1} parent=11 // pred_fallthru
          _
        // Predicated region
        $region17: #{vq_ema_forward.1} parent=11 // pred_check
          %p250 = pneg %p99
        $region18: #{vq_ema_forward.1} parent=11 // pred_check_branch
          %252 = sbr.rel (%p250) target = $region20
        $region19: #{vq_ema_forward.1} parent=11 // pred_region
          _
        $region20: #{vq_ema_forward.1} parent=11 // pred_fallthru
          _
        // Predicated region
        $region21: #{vq_ema_forward.1} parent=11 // pred_check
          %p253 = pneg %p120
        $region22: #{vq_ema_forward.1} parent=11 // pred_check_branch
          %255 = sbr.rel (%p253) target = $region24
        $region23: #{vq_ema_forward.1} parent=11 // pred_region
          _
        $region24: #{vq_ema_forward.1} parent=11 // pred_fallthru
          _
      $region12: #{vq_ema_forward.1} parent=5 // pred_fallthru
        _
      %p256 = scmp.lt.s32.totalorder %s17, 2
      // Predicated region
      $region25: #{vq_ema_forward.1} parent=5 // pred_check
        %p257 = pneg %p256
      $region26: #{vq_ema_forward.1} parent=5 // pred_check_branch
        %259 = sbr.rel (%p257) target = $region28
      $region27: #{vq_ema_forward.1} parent=5 // pred_region
        // Predicated region
        $region29: #{vq_ema_forward.1} parent=27 // pred_check
          %p260 = pneg %p51
        $region30: #{vq_ema_forward.1} parent=27 // pred_check_branch
          %262 = sbr.rel (%p260) target = $region32
        $region31: #{vq_ema_forward.1} parent=27 // pred_region
          %s263 = smul.u32 2, %s25
          %p264 = scmp.lt.s32.totalorder %s24, 1
          %s265 = scalar_select %p264, %s24, 1
          %p266 = scmp.lt.s32.totalorder %s263, 1
          %s267 = scalar_select %p266, %s263, 1
          %s268 = smul.addr %s265, 2
          %s269 = sadd.s32 %s267, %s268
          %s270 = smul.addr %s269, 8
          %s271 = scalar_lea.vmem %s0, %s270
          %s272 = smul.u32 2, %s25
        $region32: #{vq_ema_forward.1} parent=27 // pred_fallthru
          _
      $region28: #{vq_ema_forward.1} parent=5 // pred_fallthru
        _
      %p273 = scmp.le.s32.totalorder 1, %s17
      %p274 = scmp.lt.s32.totalorder %s17, 3
      %p275 = pnand %p273, %p274
      %p276 = pneg %p275
      // Predicated region
      $region33: #{vq_ema_forward.1} parent=5 // pred_check
        _
      $region34: #{vq_ema_forward.1} parent=5 // pred_check_branch
        %278 = sbr.rel (%p275) target = $region36
      $region35: #{vq_ema_forward.1} parent=5 // pred_region
        %s279 = ssub.s32 %s17, 1
        %s280 = smul.u32 2, %s27
        %p281 = scmp.lt.s32.totalorder %s26, 1
        %s282 = scalar_select %p281, %s26, 1
        %p283 = scmp.lt.s32.totalorder %s280, 1
        %s284 = scalar_select %p283, %s280, 1
        %s285 = smul.addr %s282, 2
        %s286 = sadd.s32 %s284, %s285
        %s287 = smul.addr %s286, 8
        %s288 = scalar_lea.vmem %s0, %s287
        %p289 = pneg %p57
        %p290 = pneg %p54
        %p291 = pneg %p78
        %p292 = pneg %p75
        %p293 = pneg %p99
        %p294 = pneg %p96
        %p295 = pneg %p120
        %p296 = pneg %p117
        %p297 = pneg %p148
        %p298 = pneg %p145
        %s299 = smul.u32 2, %s27
        %p300 = scmp.lt.s32.totalorder %s26, 1
        %s301 = scalar_select %p300, %s26, 1
        %p302 = scmp.lt.s32.totalorder %s299, 1
        %s303 = scalar_select %p302, %s299, 1
        %s304 = smul.addr %s301, 2
        %s305 = sadd.s32 %s303, %s304
        %s306 = smul.addr %s305, 8
        %s307 = scalar_lea.vmem %s4, %s306
        %p308 = pneg %p176
        %p309 = pneg %p173
        %s310 = sand.u32 %s163, 1
        %s311 = scalar_lea.sflag [#allocation3], %s310
        %s312 = sand.u32 %s163, 1
        %s313 = smul.addr %s312, 2
        %s314 = scalar_lea.vmem [#allocation2], %s313
        %p315 = pneg %p204
        %p316 = pneg %p201
        %p317 = scmp.lt.s32.totalorder %s26, 1
        %s318 = scalar_select %p317, %s26, 1
        %p319 = scmp.lt.s32.totalorder %s27, 0
        %s320 = scalar_select %p319, %s27, 0
        %s321 = sadd.s32 %s320, %s318
        %s322 = scalar_lea.vmem %s6, %s321
        %p323 = pneg %p232
        %p324 = pneg %p229
        %p325 = scmp.lt.s32.totalorder %s26, 1
        %s326 = scalar_select %p325, %s26, 1
        %p327 = scmp.lt.s32.totalorder %s27, 0
        %s328 = scalar_select %p327, %s27, 0
        %s329 = sadd.s32 %s328, %s326
        %s330 = scalar_lea.vmem %s7, %s329
        %s331 = smul.u32 2, %s27
        %p332 = scmp.lt.s32.totalorder %s26, 1
        %s333 = scalar_select %p332, %s26, 1
        %p334 = scmp.lt.s32.totalorder %s331, 1
        %s335 = scalar_select %p334, %s331, 1
        %s336 = smul.addr %s333, 2
        %s337 = sadd.s32 %s335, %s336
        %s338 = smul.addr %s337, 8
        %s339 = scalar_lea.vmem %s0, %s338
        %s340 = smul.u32 2, %s27
        %s341 = smul.u32 2, %s27
        %p342 = scmp.lt.s32.totalorder %s26, 1
        %s343 = scalar_select %p342, %s26, 1
        %p344 = scmp.lt.s32.totalorder %s341, 1
        %s345 = scalar_select %p344, %s341, 1
        %s346 = smul.addr %s343, 2
        %s347 = sadd.s32 %s345, %s346
        %s348 = smul.addr %s347, 8
        %s349 = scalar_lea.vmem %s4, %s348
        %s350 = smul.u32 2, %s27
        %p351 = scmp.lt.s32.totalorder %s26, 1
        %s352 = scalar_select %p351, %s26, 1
        %p353 = scmp.lt.s32.totalorder %s27, 0
        %s354 = scalar_select %p353, %s27, 0
        %s355 = sadd.s32 %s354, %s352
        %s356 = scalar_lea.vmem %s6, %s355
        %p357 = scmp.lt.s32.totalorder %s26, 1
        %s358 = scalar_select %p357, %s26, 1
        %p359 = scmp.lt.s32.totalorder %s27, 0
        %s360 = scalar_select %p359, %s27, 0
        %s361 = sadd.s32 %s360, %s358
        %s362 = scalar_lea.vmem %s7, %s361
        loop: start=0, step=1, limit=2
        $region37: #{vq_ema_forward.1} parent=35 // loop_pre_header
          _
        $region38: #{vq_ema_forward.1} parent=35 // loop_header
          %s364 = sphi 0, %s368
          %p365 = scmp.ge.s32.totalorder %s364, 2
          %v369 = vphi 0.0, %v976
          %v370 = vphi 0.0, %v977
          %v371 = vphi 0.0, %v978
          %v372 = vphi 0.0, %v979
          %v373 = vphi 0.0, %v980
          %v374 = vphi 0.0, %v981
          %v375 = vphi 0.0, %v982
          %v376 = vphi 0.0, %v983
          %v377 = vphi 0.0, %v984
          %v378 = vphi 0.0, %v985
          %v379 = vphi 0.0, %v986
          %v380 = vphi 0.0, %v987
          %v381 = vphi 0.0, %v988
          %v382 = vphi 0.0, %v989
          %v383 = vphi 0.0, %v990
          %v384 = vphi 0.0, %v991
          %s385 = sphi 0.0, %s1003
        $region39: #{vq_ema_forward.1} parent=35 // loop_header_branch
          %367 = sbr.rel (%p365) target = $region43
        $region40: #{vq_ema_forward.1} parent=35 // loop_body
          %s386 = smul.u32 %s364, 128
          %s387 = sshra.s32 %s386, 7
          %s388 = sand.u32 %s386, 127
          %s389 = smul.addr %s387, 8
          %s390 = scalar_lea.vmem %s339, %s389
          %v391 = vld [vmem:[%s390] sm:$0xff]
          %v392 = vld [vmem:[%s1] sm:$0xff]
          %v393 = vld [vmem:[%s1 + $0x8] sm:$0xff]
          %v394 = vld [vmem:[%s1 + $0x10] sm:$0xff]
          %v395 = vld [vmem:[%s1 + $0x18] sm:$0xff]
          %v396 = vld [vmem:[%s1 + $0x20] sm:$0xff]
          %v397 = vld [vmem:[%s1 + $0x28] sm:$0xff]
          %v398 = vld [vmem:[%s1 + $0x30] sm:$0xff]
          %v399 = vld [vmem:[%s1 + $0x38] sm:$0xff]
          %v400 = vld [vmem:[%s1 + $0x40] sm:$0xff]
          %v401 = vld [vmem:[%s1 + $0x48] sm:$0xff]
          %v402 = vld [vmem:[%s1 + $0x50] sm:$0xff]
          %v403 = vld [vmem:[%s1 + $0x58] sm:$0xff]
          %v404 = vld [vmem:[%s1 + $0x60] sm:$0xff]
          %v405 = vld [vmem:[%s1 + $0x68] sm:$0xff]
          %v406 = vld [vmem:[%s1 + $0x70] sm:$0xff]
          %v407 = vld [vmem:[%s1 + $0x78] sm:$0xff]
          %v408 = vld [vmem:[%s2] sm:$0xff]
          %v409 = vld [vmem:[%s2 + $0x8] sm:$0xff]
          %v410 = vld [vmem:[%s2 + $0x10] sm:$0xff]
          %v411 = vld [vmem:[%s2 + $0x18] sm:$0xff]
          %v412 = vld [vmem:[%s2 + $0x20] sm:$0xff]
          %v413 = vld [vmem:[%s2 + $0x28] sm:$0xff]
          %v414 = vld [vmem:[%s2 + $0x30] sm:$0xff]
          %v415 = vld [vmem:[%s2 + $0x38] sm:$0xff]
          %v416 = vld [vmem:[%s2 + $0x40] sm:$0xff]
          %v417 = vld [vmem:[%s2 + $0x48] sm:$0xff]
          %v418 = vld [vmem:[%s2 + $0x50] sm:$0xff]
          %v419 = vld [vmem:[%s2 + $0x58] sm:$0xff]
          %v420 = vld [vmem:[%s2 + $0x60] sm:$0xff]
          %v421 = vld [vmem:[%s2 + $0x68] sm:$0xff]
          %v422 = vld [vmem:[%s2 + $0x70] sm:$0xff]
          %v423 = vld [vmem:[%s2 + $0x78] sm:$0xff]
          %v424 = vld [vmem:[%s3] sm:$0xff]
          %426 = vset.pattern.permute.xlu0 0
          %427 = vperm.xlu0 %426, %v408
          %v428 = vpop.permute.xlu0 %427
          %431 = vset.pattern.permute.xlu0 0
          %432 = vperm.xlu0 %431, %v409
          %v433 = vpop.permute.xlu0 %432
          %436 = vset.pattern.permute.xlu0 0
          %437 = vperm.xlu0 %436, %v410
          %v438 = vpop.permute.xlu0 %437
          %441 = vset.pattern.permute.xlu0 0
          %442 = vperm.xlu0 %441, %v411
          %v443 = vpop.permute.xlu0 %442
          %446 = vset.pattern.permute.xlu0 0
          %447 = vperm.xlu0 %446, %v412
          %v448 = vpop.permute.xlu0 %447
          %451 = vset.pattern.permute.xlu0 0
          %452 = vperm.xlu0 %451, %v413
          %v453 = vpop.permute.xlu0 %452
          %456 = vset.pattern.permute.xlu0 0
          %457 = vperm.xlu0 %456, %v414
          %v458 = vpop.permute.xlu0 %457
          %461 = vset.pattern.permute.xlu0 0
          %462 = vperm.xlu0 %461, %v415
          %v463 = vpop.permute.xlu0 %462
          %466 = vset.pattern.permute.xlu0 0
          %467 = vperm.xlu0 %466, %v416
          %v468 = vpop.permute.xlu0 %467
          %471 = vset.pattern.permute.xlu0 0
          %472 = vperm.xlu0 %471, %v417
          %v473 = vpop.permute.xlu0 %472
          %476 = vset.pattern.permute.xlu0 0
          %477 = vperm.xlu0 %476, %v418
          %v478 = vpop.permute.xlu0 %477
          %481 = vset.pattern.permute.xlu0 0
          %482 = vperm.xlu0 %481, %v419
          %v483 = vpop.permute.xlu0 %482
          %486 = vset.pattern.permute.xlu0 0
          %487 = vperm.xlu0 %486, %v420
          %v488 = vpop.permute.xlu0 %487
          %491 = vset.pattern.permute.xlu0 0
          %492 = vperm.xlu0 %491, %v421
          %v493 = vpop.permute.xlu0 %492
          %496 = vset.pattern.permute.xlu0 0
          %497 = vperm.xlu0 %496, %v422
          %v498 = vpop.permute.xlu0 %497
          %501 = vset.pattern.permute.xlu0 0
          %502 = vperm.xlu0 %501, %v423
          %v503 = vpop.permute.xlu0 %502
          %vm505 = vcmask 64512
          %v507 = vsel %vm505, %v392, 0
          %v510 = vsel %vm505, %v393, 0
          %v513 = vsel %vm505, %v394, 0
          %v516 = vsel %vm505, %v395, 0
          %v519 = vsel %vm505, %v396, 0
          %v522 = vsel %vm505, %v397, 0
          %v525 = vsel %vm505, %v398, 0
          %v528 = vsel %vm505, %v399, 0
          %v531 = vsel %vm505, %v400, 0
          %v534 = vsel %vm505, %v401, 0
          %v537 = vsel %vm505, %v402, 0
          %v540 = vsel %vm505, %v403, 0
          %v543 = vsel %vm505, %v404, 0
          %v546 = vsel %vm505, %v405, 0
          %v549 = vsel %vm505, %v406, 0
          %v552 = vsel %vm505, %v407, 0
          %554 = vmatprep.subr.mxu0 0.0
          %555 = vmatpush1.msra.mxu0 %v391
          %556 = vmatprep.subr.mxu0 0.0
          %557 = vmatpush1.msra.mxu0 0.0
          %558 = vmatprep.subr.mxu0 0.0
          %559 = vmatpush1.msra.mxu0 0.0
          %560 = vmatprep.subr.mxu0 0.0
          %561 = vmatpush1.msra.mxu0 0.0
          %562 = vmatprep.subr.mxu0 0.0
          %563 = vmatpush1.msra.mxu0 0.0
          %564 = vmatprep.subr.mxu0 0.0
          %565 = vmatpush1.msra.mxu0 0.0
          %566 = vmatprep.subr.mxu0 0.0
          %567 = vmatpush1.msra.mxu0 0.0
          %568 = vmatprep.subr.mxu0 0.0
          %569 = vmatpush1.msra.mxu0 0.0
          %570 = vmatprep.subr.mxu0 0.0
          %571 = vmatpush1.msra.mxu0 0.0
          %572 = vmatprep.subr.mxu0 0.0
          %573 = vmatpush1.msra.mxu0 0.0
          %574 = vmatprep.subr.mxu0 0.0
          %575 = vmatpush1.msra.mxu0 0.0
          %576 = vmatprep.subr.mxu0 0.0
          %577 = vmatpush1.msra.mxu0 0.0
          %578 = vmatprep.subr.mxu0 0.0
          %579 = vmatpush1.msra.mxu0 0.0
          %580 = vmatprep.subr.mxu0 0.0
          %581 = vmatpush1.msra.mxu0 0.0
          %582 = vmatprep.subr.mxu0 0.0
          %583 = vmatpush1.msra.mxu0 0.0
          %584 = vmatprep.subr.mxu0 0.0
          %585 = vmatpush1.msra.mxu0 0.0
          %586 = vmatprep.subr.mxu0 0.0
          %587 = vmatpush1.msra.mxu0 0.0
          %588 = vmatprep.subr.mxu0 0.0
          %589 = vmatpush1.msra.mxu0 0.0
          %590 = vmatprep.subr.mxu0 0.0
          %591 = vmatpush1.msra.mxu0 0.0
          %592 = vmatprep.subr.mxu0 0.0
          %593 = vmatpush1.msra.mxu0 0.0
          %594 = vmatprep.subr.mxu0 0.0
          %595 = vmatpush1.msra.mxu0 0.0
          %596 = vmatprep.subr.mxu0 0.0
          %597 = vmatpush1.msra.mxu0 0.0
          %598 = vmatprep.subr.mxu0 0.0
          %599 = vmatpush1.msra.mxu0 0.0
          %600 = vmatprep.subr.mxu0 0.0
          %601 = vmatpush1.msra.mxu0 0.0
          %602 = vmatprep.subr.mxu0 0.0
          %603 = vmatpush1.msra.mxu0 0.0
          %604 = vmatprep.subr.mxu0 0.0
          %605 = vmatpush1.msra.mxu0 0.0
          %606 = vmatprep.subr.mxu0 0.0
          %607 = vmatpush1.msra.mxu0 0.0
          %608 = vmatprep.subr.mxu0 0.0
          %609 = vmatpush1.msra.mxu0 0.0
          %610 = vmatprep.subr.mxu0 0.0
          %611 = vmatpush1.msra.mxu0 0.0
          %612 = vmatprep.subr.mxu0 0.0
          %613 = vmatpush1.msra.mxu0 0.0
          %614 = vmatprep.subr.mxu0 0.0
          %615 = vmatpush1.msra.mxu0 0.0
          %616 = vmatprep.subr.mxu0 0.0
          %617 = vmatpush1.msra.mxu0 0.0
          %618 = vmatprep.mubr.f32.mxu0 0.0
          %619 = vmatmul.mubr.f32.gmra.mrb[0].mxu0 %v507
          %v620 = vpop.f32.mrb[0].mxu0
          %v621 = vadd.f32 %v428, %v620
          %v622 = vpop.f32.mrb[0].mxu0
          %623 = vmatprep.mubr.f32.mxu0 0.0
          %624 = vmatmul.mubr.f32.gmra.mrb[0].mxu0 %v510
          %v625 = vpop.f32.mrb[0].mxu0
          %v626 = vadd.f32 %v433, %v625
          %v627 = vpop.f32.mrb[0].mxu0
          %628 = vmatprep.mubr.f32.mxu0 0.0
          %629 = vmatmul.mubr.f32.gmra.mrb[0].mxu0 %v513
          %v630 = vpop.f32.mrb[0].mxu0
          %v631 = vadd.f32 %v438, %v630
          %v632 = vpop.f32.mrb[0].mxu0
          %633 = vmatprep.mubr.f32.mxu0 0.0
          %634 = vmatmul.mubr.f32.gmra.mrb[0].mxu0 %v516
          %v635 = vpop.f32.mrb[0].mxu0
          %v636 = vadd.f32 %v443, %v635
          %v637 = vpop.f32.mrb[0].mxu0
          %638 = vmatprep.mubr.f32.mxu0 0.0
          %639 = vmatmul.mubr.f32.gmra.mrb[0].mxu0 %v519
          %v640 = vpop.f32.mrb[0].mxu0
          %v641 = vadd.f32 %v448, %v640
          %v642 = vpop.f32.mrb[0].mxu0
          %643 = vmatprep.mubr.f32.mxu0 0.0
          %644 = vmatmul.mubr.f32.gmra.mrb[0].mxu0 %v522
          %v645 = vpop.f32.mrb[0].mxu0
          %v646 = vadd.f32 %v453, %v645
          %v647 = vpop.f32.mrb[0].mxu0
          %648 = vmatprep.mubr.f32.mxu0 0.0
          %649 = vmatmul.mubr.f32.gmra.mrb[0].mxu0 %v525
          %v650 = vpop.f32.mrb[0].mxu0
          %v651 = vadd.f32 %v458, %v650
          %v652 = vpop.f32.mrb[0].mxu0
          %653 = vmatprep.mubr.f32.mxu0 0.0
          %654 = vmatmul.mubr.f32.gmra.mrb[0].mxu0 %v528
          %v655 = vpop.f32.mrb[0].mxu0
          %v656 = vadd.f32 %v463, %v655
          %v657 = vpop.f32.mrb[0].mxu0
          %658 = vmatprep.mubr.f32.mxu0 0.0
          %659 = vmatmul.mubr.f32.gmra.mrb[0].mxu0 %v531
          %v660 = vpop.f32.mrb[0].mxu0
          %v661 = vadd.f32 %v468, %v660
          %v662 = vpop.f32.mrb[0].mxu0
          %663 = vmatprep.mubr.f32.mxu0 0.0
          %664 = vmatmul.mubr.f32.gmra.mrb[0].mxu0 %v534
          %v665 = vpop.f32.mrb[0].mxu0
          %v666 = vadd.f32 %v473, %v665
          %v667 = vpop.f32.mrb[0].mxu0
          %668 = vmatprep.mubr.f32.mxu0 0.0
          %669 = vmatmul.mubr.f32.gmra.mrb[0].mxu0 %v537
          %v670 = vpop.f32.mrb[0].mxu0
          %v671 = vadd.f32 %v478, %v670
          %v672 = vpop.f32.mrb[0].mxu0
          %673 = vmatprep.mubr.f32.mxu0 0.0
          %674 = vmatmul.mubr.f32.gmra.mrb[0].mxu0 %v540
          %v675 = vpop.f32.mrb[0].mxu0
          %v676 = vadd.f32 %v483, %v675
          %v677 = vpop.f32.mrb[0].mxu0
          %678 = vmatprep.mubr.f32.mxu0 0.0
          %679 = vmatmul.mubr.f32.gmra.mrb[0].mxu0 %v543
          %v680 = vpop.f32.mrb[0].mxu0
          %v681 = vadd.f32 %v488, %v680
          %v682 = vpop.f32.mrb[0].mxu0
          %683 = vmatprep.mubr.f32.mxu0 0.0
          %684 = vmatmul.mubr.f32.gmra.mrb[0].mxu0 %v546
          %v685 = vpop.f32.mrb[0].mxu0
          %v686 = vadd.f32 %v493, %v685
          %v687 = vpop.f32.mrb[0].mxu0
          %688 = vmatprep.mubr.f32.mxu0 0.0
          %689 = vmatmul.mubr.f32.gmra.mrb[0].mxu0 %v549
          %v690 = vpop.f32.mrb[0].mxu0
          %v691 = vadd.f32 %v498, %v690
          %v692 = vpop.f32.mrb[0].mxu0
          %693 = vmatprep.mubr.f32.mxu0 0.0
          %694 = vmatmul.mubr.f32.gmra.mrb[0].mxu0 %v552
          %v695 = vpop.f32.mrb[0].mxu0
          %v696 = vadd.f32 %v503, %v695
          %v697 = vpop.f32.mrb[0].mxu0
          %698 = vdwg.mxu0
          %v699 = vmin.f32 %v621, %v641
          %v700 = vmin.f32 %v626, %v646
          %v701 = vmin.f32 %v631, %v651
          %v702 = vmin.f32 %v636, %v656
          %v703 = vmin.f32 %v699, %v661
          %v704 = vmin.f32 %v700, %v666
          %v705 = vmin.f32 %v701, %v671
          %v706 = vmin.f32 %v702, %v676
          %v707 = vmin.f32 %v703, %v681
          %v708 = vmin.f32 %v704, %v686
          %v709 = vmin.f32 %v705, %v691
          %v710 = vmin.f32 %v706, %v696
          %v711 = vmin.f32 %v707, %v708
          %v712 = vmin.f32 %v709, %v710
          %v713 = vmin.f32 %v711, %v712
          %v714 = vrot.slane %v713, 4
          %v715 = vmin.f32 %v713, %v714
          %v716 = vrot.slane %v715, 2
          %v717 = vmin.f32 %v715, %v716
          %v718 = vrot.slane %v717, 1
          %v719 = vmin.f32 %v717, %v718
          %v720 = vlaneseq
          %v721 = vshrl.u32 %v720, 7
          %v722 = vadd.s32 %v721, 8
          %v723 = vadd.s32 %v721, 16
          %v724 = vadd.s32 %v721, 24
          %v725 = vadd.s32 %v721, 32
          %v726 = vadd.s32 %v721, 40
          %v727 = vadd.s32 %v721, 48
          %v728 = vadd.s32 %v721, 56
          %v729 = vadd.s32 %v721, 64
          %v730 = vadd.s32 %v721, 72
          %v731 = vadd.s32 %v721, 80
          %v732 = vadd.s32 %v721, 88
          %v733 = vadd.s32 %v721, 96
          %v734 = vadd.s32 %v721, 104
          %v735 = vadd.s32 %v721, 112
          %v736 = vadd.s32 %v721, 120
          %vm737 = vcmp.eq.f32.partialorder %v621, %v719
          %vm738 = vcmp.eq.f32.partialorder %v626, %v719
          %vm739 = vcmp.eq.f32.partialorder %v631, %v719
          %vm740 = vcmp.eq.f32.partialorder %v636, %v719
          %vm741 = vcmp.eq.f32.partialorder %v641, %v719
          %vm742 = vcmp.eq.f32.partialorder %v646, %v719
          %vm743 = vcmp.eq.f32.partialorder %v651, %v719
          %vm744 = vcmp.eq.f32.partialorder %v656, %v719
          %vm745 = vcmp.eq.f32.partialorder %v661, %v719
          %vm746 = vcmp.eq.f32.partialorder %v666, %v719
          %vm747 = vcmp.eq.f32.partialorder %v671, %v719
          %vm748 = vcmp.eq.f32.partialorder %v676, %v719
          %vm749 = vcmp.eq.f32.partialorder %v681, %v719
          %vm750 = vcmp.eq.f32.partialorder %v686, %v719
          %vm751 = vcmp.eq.f32.partialorder %v691, %v719
          %vm752 = vcmp.eq.f32.partialorder %v696, %v719
          %v753 = vsel %vm737, %v721, 128
          %v754 = vsel %vm738, %v722, 128
          %v755 = vsel %vm739, %v723, 128
          %v756 = vsel %vm740, %v724, 128
          %v757 = vsel %vm741, %v725, 128
          %v758 = vsel %vm742, %v726, 128
          %v759 = vsel %vm743, %v727, 128
          %v760 = vsel %vm744, %v728, 128
          %v761 = vsel %vm745, %v729, 128
          %v762 = vsel %vm746, %v730, 128
          %v763 = vsel %vm747, %v731, 128
          %v764 = vsel %vm748, %v732, 128
          %v765 = vsel %vm749, %v733, 128
          %v766 = vsel %vm750, %v734, 128
          %v767 = vsel %vm751, %v735, 128
          %v768 = vsel %vm752, %v736, 128
          %vm769 = vcmp.lt.s32.totalorder %v753, %v757
          %v770 = vsel %vm769, %v753, %v757
          %vm771 = vcmp.lt.s32.totalorder %v754, %v758
          %v772 = vsel %vm771, %v754, %v758
          %vm773 = vcmp.lt.s32.totalorder %v755, %v759
          %v774 = vsel %vm773, %v755, %v759
          %vm775 = vcmp.lt.s32.totalorder %v756, %v760
          %v776 = vsel %vm775, %v756, %v760
          %vm777 = vcmp.lt.s32.totalorder %v770, %v761
          %v778 = vsel %vm777, %v770, %v761
          %vm779 = vcmp.lt.s32.totalorder %v772, %v762
          %v780 = vsel %vm779, %v772, %v762
          %vm781 = vcmp.lt.s32.totalorder %v774, %v763
          %v782 = vsel %vm781, %v774, %v763
          %vm783 = vcmp.lt.s32.totalorder %v776, %v764
          %v784 = vsel %vm783, %v776, %v764
          %vm785 = vcmp.lt.s32.totalorder %v778, %v765
          %v786 = vsel %vm785, %v778, %v765
          %vm787 = vcmp.lt.s32.totalorder %v780, %v766
          %v788 = vsel %vm787, %v780, %v766
          %vm789 = vcmp.lt.s32.totalorder %v782, %v767
          %v790 = vsel %vm789, %v782, %v767
          %vm791 = vcmp.lt.s32.totalorder %v784, %v768
          %v792 = vsel %vm791, %v784, %v768
          %vm793 = vcmp.lt.s32.totalorder %v786, %v788
          %v794 = vsel %vm793, %v786, %v788
          %vm795 = vcmp.lt.s32.totalorder %v790, %v792
          %v796 = vsel %vm795, %v790, %v792
          %vm797 = vcmp.lt.s32.totalorder %v794, %v796
          %v798 = vsel %vm797, %v794, %v796
          %v799 = vrot.slane %v798, 4
          %vm800 = vcmp.lt.s32.totalorder %v798, %v799
          %v801 = vsel %vm800, %v798, %v799
          %v802 = vrot.slane %v801, 2
          %vm803 = vcmp.lt.s32.totalorder %v801, %v802
          %v804 = vsel %vm803, %v801, %v802
          %v805 = vrot.slane %v804, 1
          %vm806 = vcmp.lt.s32.totalorder %v804, %v805
          %v807 = vsel %vm806, %v804, %v805
          %vm808 = vcmp.eq.s32.totalorder %v721, %v807
          %vm809 = vcmp.eq.s32.totalorder %v722, %v807
          %vm810 = vcmp.eq.s32.totalorder %v723, %v807
          %vm811 = vcmp.eq.s32.totalorder %v724, %v807
          %vm812 = vcmp.eq.s32.totalorder %v725, %v807
          %vm813 = vcmp.eq.s32.totalorder %v726, %v807
          %vm814 = vcmp.eq.s32.totalorder %v727, %v807
          %vm815 = vcmp.eq.s32.totalorder %v728, %v807
          %vm816 = vcmp.eq.s32.totalorder %v729, %v807
          %vm817 = vcmp.eq.s32.totalorder %v730, %v807
          %vm818 = vcmp.eq.s32.totalorder %v731, %v807
          %vm819 = vcmp.eq.s32.totalorder %v732, %v807
          %vm820 = vcmp.eq.s32.totalorder %v733, %v807
          %vm821 = vcmp.eq.s32.totalorder %v734, %v807
          %vm822 = vcmp.eq.s32.totalorder %v735, %v807
          %vm823 = vcmp.eq.s32.totalorder %v736, %v807
          %v824 = vsel %vm808, 1, 0
          %v825 = vsel %vm809, 1, 0
          %v826 = vsel %vm810, 1, 0
          %v827 = vsel %vm811, 1, 0
          %v828 = vsel %vm812, 1, 0
          %v829 = vsel %vm813, 1, 0
          %v830 = vsel %vm814, 1, 0
          %v831 = vsel %vm815, 1, 0
          %v832 = vsel %vm816, 1, 0
          %v833 = vsel %vm817, 1, 0
          %v834 = vsel %vm818, 1, 0
          %v835 = vsel %vm819, 1, 0
          %v836 = vsel %vm820, 1, 0
          %v837 = vsel %vm821, 1, 0
          %v838 = vsel %vm822, 1, 0
          %v839 = vsel %vm823, 1, 0
          %v840 = vcvt.s32.f32 %v824
          %v841 = vcvt.s32.f32 %v825
          %v842 = vcvt.s32.f32 %v826
          %v843 = vcvt.s32.f32 %v827
          %v844 = vcvt.s32.f32 %v828
          %v845 = vcvt.s32.f32 %v829
          %v846 = vcvt.s32.f32 %v830
          %v847 = vcvt.s32.f32 %v831
          %v848 = vcvt.s32.f32 %v832
          %v849 = vcvt.s32.f32 %v833
          %v850 = vcvt.s32.f32 %v834
          %v851 = vcvt.s32.f32 %v835
          %v852 = vcvt.s32.f32 %v836
          %v853 = vcvt.s32.f32 %v837
          %v854 = vcvt.s32.f32 %v838
          %v855 = vcvt.s32.f32 %v839
          %856 = vmatprep.subr.mxu0 0.0
          %857 = vmatpush1.msra.mxu0 %v840
          %858 = vmatprep.subr.mxu0 0.0
          %859 = vmatpush1.msra.mxu0 %v841
          %860 = vmatprep.subr.mxu0 0.0
          %861 = vmatpush1.msra.mxu0 %v842
          %862 = vmatprep.subr.mxu0 0.0
          %863 = vmatpush1.msra.mxu0 %v843
          %864 = vmatprep.subr.mxu0 0.0
          %865 = vmatpush1.msra.mxu0 %v844
          %866 = vmatprep.subr.mxu0 0.0
          %867 = vmatpush1.msra.mxu0 %v845
          %868 = vmatprep.subr.mxu0 0.0
          %869 = vmatpush1.msra.mxu0 %v846
          %870 = vmatprep.subr.mxu0 0.0
          %871 = vmatpush1.msra.mxu0 %v847
          %872 = vmatprep.subr.mxu0 0.0
          %873 = vmatpush1.msra.mxu0 %v848
          %874 = vmatprep.subr.mxu0 0.0
          %875 = vmatpush1.msra.mxu0 %v849
          %876 = vmatprep.subr.mxu0 0.0
          %877 = vmatpush1.msra.mxu0 %v850
          %878 = vmatprep.subr.mxu0 0.0
          %879 = vmatpush1.msra.mxu0 %v851
          %880 = vmatprep.subr.mxu0 0.0
          %881 = vmatpush1.msra.mxu0 %v852
          %882 = vmatprep.subr.mxu0 0.0
          %883 = vmatpush1.msra.mxu0 %v853
          %884 = vmatprep.subr.mxu0 0.0
          %885 = vmatpush1.msra.mxu0 %v854
          %886 = vmatprep.subr.mxu0 0.0
          %887 = vmatpush1.msra.mxu0 %v855
          %888 = vmatprep.subr.mxu0 0.0
          %889 = vmatpush1.msra.mxu0 0.0
          %890 = vmatprep.subr.mxu0 0.0
          %891 = vmatpush1.msra.mxu0 0.0
          %892 = vmatprep.subr.mxu0 0.0
          %893 = vmatpush1.msra.mxu0 0.0
          %894 = vmatprep.subr.mxu0 0.0
          %895 = vmatpush1.msra.mxu0 0.0
          %896 = vmatprep.subr.mxu0 0.0
          %897 = vmatpush1.msra.mxu0 0.0
          %898 = vmatprep.subr.mxu0 0.0
          %899 = vmatpush1.msra.mxu0 0.0
          %900 = vmatprep.subr.mxu0 0.0
          %901 = vmatpush1.msra.mxu0 0.0
          %902 = vmatprep.subr.mxu0 0.0
          %903 = vmatpush1.msra.mxu0 0.0
          %904 = vmatprep.subr.mxu0 0.0
          %905 = vmatpush1.msra.mxu0 0.0
          %906 = vmatprep.subr.mxu0 0.0
          %907 = vmatpush1.msra.mxu0 0.0
          %908 = vmatprep.subr.mxu0 0.0
          %909 = vmatpush1.msra.mxu0 0.0
          %910 = vmatprep.subr.mxu0 0.0
          %911 = vmatpush1.msra.mxu0 0.0
          %912 = vmatprep.subr.mxu0 0.0
          %913 = vmatpush1.msra.mxu0 0.0
          %914 = vmatprep.subr.mxu0 0.0
          %915 = vmatpush1.msra.mxu0 0.0
          %916 = vmatprep.subr.mxu0 0.0
          %917 = vmatpush1.msra.mxu0 0.0
          %918 = vmatprep.subr.mxu0 0.0
          %919 = vmatpush1.msra.mxu0 0.0
          %920 = vmatprep.mubr.f32.mxu0 0.0
          %921 = vmatmul.mubr.f32.gmra.mrb[0].mxu0 %v424
          %v922 = vpop.f32.mrb[0].mxu0
          %v923 = vadd.f32 0.0, %v922
          %v924 = vpop.f32.mrb[0].mxu0
          %925 = vdwg.mxu0
          %s926 = scalar_lea.vmem %s314, %s387 [#allocation2]
          %v927 = vlaneseq
          %vm928 = vcmp.ge.s32.totalorder %v927, 0
          %vm929 = vcmp.lt.s32.totalorder %v927, 128
          %vm930 = vmand %vm928, %vm929
          %931 = vst.msk [vmem:[%s926] sm:$0x1] %vm930, %v807
          %s932 = smul.addr %s387, 8
          %s933 = scalar_lea.vmem %s349, %s932
          %934 = vst [vmem:[%s933] sm:$0xff] %v923
          %v935 = vmul.f32 %v391, %v391
          %v936 = vrot.slane %v935, 4
          %v937 = vadd.f32 %v935, %v936
          %v938 = vrot.slane %v937, 2
          %v939 = vadd.f32 %v937, %v938
          %v940 = vrot.slane %v939, 1
          %v941 = vadd.f32 %v939, %v940
          %v942 = vadd.f32 %v719, %v941
          %v943 = vmax.f32 %v942, 0.0
          %944 = vadd.xlane.f32.xlu0 %v840
          %v945 = vpop.xlane.xlu0 %944
          %946 = vadd.xlane.f32.xlu0 %v841
          %v947 = vpop.xlane.xlu0 %946
          %948 = vadd.xlane.f32.xlu0 %v842
          %v949 = vpop.xlane.xlu0 %948
          %950 = vadd.xlane.f32.xlu0 %v843
          %v951 = vpop.xlane.xlu0 %950
          %952 = vadd.xlane.f32.xlu0 %v844
          %v953 = vpop.xlane.xlu0 %952
          %954 = vadd.xlane.f32.xlu0 %v845
          %v955 = vpop.xlane.xlu0 %954
          %956 = vadd.xlane.f32.xlu0 %v846
          %v957 = vpop.xlane.xlu0 %956
          %958 = vadd.xlane.f32.xlu0 %v847
          %v959 = vpop.xlane.xlu0 %958
          %960 = vadd.xlane.f32.xlu0 %v848
          %v961 = vpop.xlane.xlu0 %960
          %962 = vadd.xlane.f32.xlu0 %v849
          %v963 = vpop.xlane.xlu0 %962
          %964 = vadd.xlane.f32.xlu0 %v850
          %v965 = vpop.xlane.xlu0 %964
          %966 = vadd.xlane.f32.xlu0 %v851
          %v967 = vpop.xlane.xlu0 %966
          %968 = vadd.xlane.f32.xlu0 %v852
          %v969 = vpop.xlane.xlu0 %968
          %970 = vadd.xlane.f32.xlu0 %v853
          %v971 = vpop.xlane.xlu0 %970
          %972 = vadd.xlane.f32.xlu0 %v854
          %v973 = vpop.xlane.xlu0 %972
          %974 = vadd.xlane.f32.xlu0 %v855
          %v975 = vpop.xlane.xlu0 %974
          %v976 = vadd.f32 %v369, %v945
          %v977 = vadd.f32 %v370, %v947
          %v978 = vadd.f32 %v371, %v949
          %v979 = vadd.f32 %v372, %v951
          %v980 = vadd.f32 %v373, %v953
          %v981 = vadd.f32 %v374, %v955
          %v982 = vadd.f32 %v375, %v957
          %v983 = vadd.f32 %v376, %v959
          %v984 = vadd.f32 %v377, %v961
          %v985 = vadd.f32 %v378, %v963
          %v986 = vadd.f32 %v379, %v965
          %v987 = vadd.f32 %v380, %v967
          %v988 = vadd.f32 %v381, %v969
          %v989 = vadd.f32 %v382, %v971
          %v990 = vadd.f32 %v383, %v973
          %v991 = vadd.f32 %v384, %v975
          %vm992 = vcmask 1040384
          %v993 = vsel %vm992, %v943, 0.0
          %994 = vadd.xlane.f32.xlu0 %v993
          %v995 = vpop.xlane.xlu0 %994
          %v996 = vrot.slane %v995, 4
          %v997 = vadd.f32 %v995, %v996
          %v998 = vrot.slane %v997, 2
          %v999 = vadd.f32 %v997, %v998
          %v1000 = vrot.slane %v999, 1
          %v1001 = vadd.f32 %v999, %v1000
          %s1002 = vtos %v1001
          %s1003 = sadd.f32 %s385, %s1002
        $region41: #{vq_ema_forward.1} parent=35 // loop_footer
          %s368 = sadd.s32 1, %s364
        $region42: #{vq_ema_forward.1} parent=35 // loop_footer_branch
          %363 = sbr.rel target = $region38
        $region43: #{vq_ema_forward.1} parent=35 // loop_exit
          _
        %v1020 = vlaneseq
        %v1021 = vand.u32 %v1020, 127
        %v1022 = vlaneseq
        %v1023 = vshrl.u32 %v1022, 7
        %v1024 = vsub.s32 %v1021, %v1023
        %v1025 = vrot.slane %v369, %v1024
        %v1026 = vadd.s32 %v1021, 4294967288
        %v1027 = vlaneseq
        %v1028 = vshrl.u32 %v1027, 7
        %v1029 = vsub.s32 %v1026, %v1028
        %v1030 = vrot.slane %v370, %v1029
        %vm1031 = vcmask 130112
        %v1032 = vsel %vm1031, %v1030, %v1025
        %v1033 = vadd.s32 %v1021, 4294967280
        %v1034 = vlaneseq
        %v1035 = vshrl.u32 %v1034, 7
        %v1036 = vsub.s32 %v1033, %v1035
        %v1037 = vrot.slane %v371, %v1036
        %vm1038 = vcmask 195712
        %v1039 = vsel %vm1038, %v1037, %v1032
        %v1040 = vadd.s32 %v1021, 4294967272
        %v1041 = vlaneseq
        %v1042 = vshrl.u32 %v1041, 7
        %v1043 = vsub.s32 %v1040, %v1042
        %v1044 = vrot.slane %v372, %v1043
        %vm1045 = vcmask 261312
        %v1046 = vsel %vm1045, %v1044, %v1039
        %v1047 = vadd.s32 %v1021, 4294967264
        %v1048 = vlaneseq
        %v1049 = vshrl.u32 %v1048, 7
        %v1050 = vsub.s32 %v1047, %v1049
        %v1051 = vrot.slane %v373, %v1050
        %vm1052 = vcmask 326912
        %v1053 = vsel %vm1052, %v1051, %v1046
        %v1054 = vadd.s32 %v1021, 4294967256
        %v1055 = vlaneseq
        %v1056 = vshrl.u32 %v1055, 7
        %v1057 = vsub.s32 %v1054, %v1056
        %v1058 = vrot.slane %v374, %v1057
        %vm1059 = vcmask 392512
        %v1060 = vsel %vm1059, %v1058, %v1053
        %v1061 = vadd.s32 %v1021, 4294967248
        %v1062 = vlaneseq
        %v1063 = vshrl.u32 %v1062, 7
        %v1064 = vsub.s32 %v1061, %v1063
        %v1065 = vrot.slane %v375, %v1064
        %vm1066 = vcmask 458112
        %v1067 = vsel %vm1066, %v1065, %v1060
        %v1068 = vadd.s32 %v1021, 4294967240
        %v1069 = vlaneseq
        %v1070 = vshrl.u32 %v1069, 7
        %v1071 = vsub.s32 %v1068, %v1070
        %v1072 = vrot.slane %v376, %v1071
        %vm1073 = vcmask 523712
        %v1074 = vsel %vm1073, %v1072, %v1067
        %v1075 = vadd.s32 %v1021, 4294967232
        %v1076 = vlaneseq
        %v1077 = vshrl.u32 %v1076, 7
        %v1078 = vsub.s32 %v1075, %v1077
        %v1079 = vrot.slane %v377, %v1078
        %vm1080 = vcmask 589312
        %v1081 = vsel %vm1080, %v1079, %v1074
        %v1082 = vadd.s32 %v1021, 4294967224
        %v1083 = vlaneseq
        %v1084 = vshrl.u32 %v1083, 7
        %v1085 = vsub.s32 %v1082, %v1084
        %v1086 = vrot.slane %v378, %v1085
        %vm1087 = vcmask 654912
        %v1088 = vsel %vm1087, %v1086, %v1081
        %v1089 = vadd.s32 %v1021, 4294967216
        %v1090 = vlaneseq
        %v1091 = vshrl.u32 %v1090, 7
        %v1092 = vsub.s32 %v1089, %v1091
        %v1093 = vrot.slane %v379, %v1092
        %vm1094 = vcmask 720512
        %v1095 = vsel %vm1094, %v1093, %v1088
        %v1096 = vadd.s32 %v1021, 4294967208
        %v1097 = vlaneseq
        %v1098 = vshrl.u32 %v1097, 7
        %v1099 = vsub.s32 %v1096, %v1098
        %v1100 = vrot.slane %v380, %v1099
        %vm1101 = vcmask 786112
        %v1102 = vsel %vm1101, %v1100, %v1095
        %v1103 = vadd.s32 %v1021, 4294967200
        %v1104 = vlaneseq
        %v1105 = vshrl.u32 %v1104, 7
        %v1106 = vsub.s32 %v1103, %v1105
        %v1107 = vrot.slane %v381, %v1106
        %vm1108 = vcmask 851712
        %v1109 = vsel %vm1108, %v1107, %v1102
        %v1110 = vadd.s32 %v1021, 4294967192
        %v1111 = vlaneseq
        %v1112 = vshrl.u32 %v1111, 7
        %v1113 = vsub.s32 %v1110, %v1112
        %v1114 = vrot.slane %v382, %v1113
        %vm1115 = vcmask 917312
        %v1116 = vsel %vm1115, %v1114, %v1109
        %v1117 = vadd.s32 %v1021, 4294967184
        %v1118 = vlaneseq
        %v1119 = vshrl.u32 %v1118, 7
        %v1120 = vsub.s32 %v1117, %v1119
        %v1121 = vrot.slane %v383, %v1120
        %vm1122 = vcmask 982912
        %v1123 = vsel %vm1122, %v1121, %v1116
        %v1124 = vadd.s32 %v1021, 4294967176
        %v1125 = vlaneseq
        %v1126 = vshrl.u32 %v1125, 7
        %v1127 = vsub.s32 %v1124, %v1126
        %v1128 = vrot.slane %v384, %v1127
        %vm1129 = vcmask 1048512
        %v1130 = vsel %vm1129, %v1128, %v1123
        %1132 = vst [vmem:[%s356] sm:$0x1] %v1130
        %v1133 = vstv %s385
        %vm1134 = vcmask 0
        %1135 = vst.msk [vmem:[%s362] sm:$0x1] %vm1134, %v1133
        %s1136 = smul.u32 2, %s27
        %p1137 = scmp.lt.s32.totalorder %s26, 1
        %s1138 = scalar_select %p1137, %s26, 1
        %p1139 = scmp.lt.s32.totalorder %s1136, 1
        %s1140 = scalar_select %p1139, %s1136, 1
        %s1141 = smul.addr %s1138, 2
        %s1142 = sadd.s32 %s1140, %s1141
        %s1143 = smul.addr %s1142, 8
        %s1144 = scalar_lea.vmem %s4, %s1143
        %s1145 = sand.u32 %s163, 1
        %s1146 = scalar_lea.sflag [#allocation3], %s1145
        %s1147 = sand.u32 %s163, 1
        %s1148 = smul.addr %s1147, 2
        %s1149 = scalar_lea.vmem [#allocation2], %s1148
        %p1150 = scmp.lt.s32.totalorder %s26, 1
        %s1151 = scalar_select %p1150, %s26, 1
        %p1152 = scmp.lt.s32.totalorder %s27, 0
        %s1153 = scalar_select %p1152, %s27, 0
        %s1154 = sadd.s32 %s1153, %s1151
        %s1155 = scalar_lea.vmem %s6, %s1154
        %p1156 = scmp.lt.s32.totalorder %s26, 1
        %s1157 = scalar_select %p1156, %s26, 1
        %p1158 = scmp.lt.s32.totalorder %s27, 0
        %s1159 = scalar_select %p1158, %s27, 0
        %s1160 = sadd.s32 %s1159, %s1157
        %s1161 = scalar_lea.vmem %s7, %s1160
        // Predicated region
        $region44: #{vq_ema_forward.1} parent=35 // pred_check
          %p1162 = pneg %p145
        $region45: #{vq_ema_forward.1} parent=35 // pred_check_branch
          %1164 = sbr.rel (%p1162) target = $region47
        $region46: #{vq_ema_forward.1} parent=35 // pred_region
          %s1165 = smul.u32 2, %s27
        $region47: #{vq_ema_forward.1} parent=35 // pred_fallthru
          _
        // Predicated region
        $region48: #{vq_ema_forward.1} parent=35 // pred_check
          %p1166 = pneg %p173
        $region49: #{vq_ema_forward.1} parent=35 // pred_check_branch
          %1168 = sbr.rel (%p1166) target = $region51
        $region50: #{vq_ema_forward.1} parent=35 // pred_region
          %s1170 = ssub.s32 32, 32
          %1171 = vsyncadd %s1146, %s1170
          %s1172 = smul.addr %s27, 2
          %s1173 = smul.addr %s26, 2
          %s1174 = sadd.s32 %s1172, %s1173
          %s1175 = smul.addr %s1174, 16
          %s1176 = scalar_lea.hbm %s5, %s1175
          %s1178 = sshll.u32 %s1149, 4
          %s1179 = int_to_ptr.vmem [resolvable:$true] %s1178
          %1181 = dma.vmem_to_hbm [thread:$0]  %s1179, 32, %s1176, %s1146
        $region51: #{vq_ema_forward.1} parent=35 // pred_fallthru
          _
        // Predicated region
        $region52: #{vq_ema_forward.1} parent=35 // pred_check
          %p1182 = pneg %p201
        $region53: #{vq_ema_forward.1} parent=35 // pred_check_branch
          %1184 = sbr.rel (%p1182) target = $region55
        $region54: #{vq_ema_forward.1} parent=35 // pred_region
          _
        $region55: #{vq_ema_forward.1} parent=35 // pred_fallthru
          _
        // Predicated region
        $region56: #{vq_ema_forward.1} parent=35 // pred_check
          %p1185 = pneg %p229
        $region57: #{vq_ema_forward.1} parent=35 // pred_check_branch
          %1187 = sbr.rel (%p1185) target = $region59
        $region58: #{vq_ema_forward.1} parent=35 // pred_region
          _
        $region59: #{vq_ema_forward.1} parent=35 // pred_fallthru
          _
      $region36: #{vq_ema_forward.1} parent=5 // pred_fallthru
        _
      %p1188 = scmp.le.s32.totalorder 2, %s17
      // Predicated region
      $region60: #{vq_ema_forward.1} parent=5 // pred_check
        %p1189 = pneg %p1188
      $region61: #{vq_ema_forward.1} parent=5 // pred_check_branch
        %1191 = sbr.rel (%p1189) target = $region63
      $region62: #{vq_ema_forward.1} parent=5 // pred_region
        %s1192 = ssub.s32 %s17, 2
        // Predicated region
        $region64: #{vq_ema_forward.1} parent=62 // pred_check
          %p1193 = pneg %p151
        $region65: #{vq_ema_forward.1} parent=62 // pred_check_branch
          %1195 = sbr.rel (%p1193) target = $region67
        $region66: #{vq_ema_forward.1} parent=62 // pred_region
          %s1196 = smul.u32 2, %s29
          %p1197 = scmp.lt.s32.totalorder %s28, 1
          %s1198 = scalar_select %p1197, %s28, 1
          %p1199 = scmp.lt.s32.totalorder %s1196, 1
          %s1200 = scalar_select %p1199, %s1196, 1
          %s1201 = smul.addr %s1198, 2
          %s1202 = sadd.s32 %s1200, %s1201
          %s1203 = smul.addr %s1202, 8
          %s1204 = scalar_lea.vmem %s4, %s1203
        $region67: #{vq_ema_forward.1} parent=62 // pred_fallthru
          _
        // Predicated region
        $region68: #{vq_ema_forward.1} parent=62 // pred_check
          %p1205 = pneg %p179
        $region69: #{vq_ema_forward.1} parent=62 // pred_check_branch
          %1207 = sbr.rel (%p1205) target = $region71
        $region70: #{vq_ema_forward.1} parent=62 // pred_region
          %s1208 = sand.u32 %s164, 1
          %s1209 = scalar_lea.sflag [#allocation3], %s1208
          %s1210 = sand.u32 %s164, 1
          %s1211 = smul.addr %s1210, 2
          %s1212 = scalar_lea.vmem [#allocation2], %s1211
          %1213 = dma.done %s1209, 32
        $region71: #{vq_ema_forward.1} parent=62 // pred_fallthru
          _
        // Predicated region
        $region72: #{vq_ema_forward.1} parent=62 // pred_check
          %p1214 = pneg %p207
        $region73: #{vq_ema_forward.1} parent=62 // pred_check_branch
          %1216 = sbr.rel (%p1214) target = $region75
        $region74: #{vq_ema_forward.1} parent=62 // pred_region
          %p1217 = scmp.lt.s32.totalorder %s28, 1
          %s1218 = scalar_select %p1217, %s28, 1
          %p1219 = scmp.lt.s32.totalorder %s29, 0
          %s1220 = scalar_select %p1219, %s29, 0
          %s1221 = sadd.s32 %s1220, %s1218
          %s1222 = scalar_lea.vmem %s6, %s1221
        $region75: #{vq_ema_forward.1} parent=62 // pred_fallthru
          _
        // Predicated region
        $region76: #{vq_ema_forward.1} parent=62 // pred_check
          %p1223 = pneg %p235
        $region77: #{vq_ema_forward.1} parent=62 // pred_check_branch
          %1225 = sbr.rel (%p1223) target = $region79
        $region78: #{vq_ema_forward.1} parent=62 // pred_region
          %p1226 = scmp.lt.s32.totalorder %s28, 1
          %s1227 = scalar_select %p1226, %s28, 1
          %p1228 = scmp.lt.s32.totalorder %s29, 0
          %s1229 = scalar_select %p1228, %s29, 0
          %s1230 = sadd.s32 %s1229, %s1227
          %s1231 = scalar_lea.vmem %s7, %s1230
        $region79: #{vq_ema_forward.1} parent=62 // pred_fallthru
          _
      $region63: #{vq_ema_forward.1} parent=5 // pred_fallthru
        _
    $region6: #{vq_ema_forward.1} parent=1 // loop_footer
      %s21 = sadd.s32 1, %s17
    $region7: #{vq_ema_forward.1} parent=1 // loop_footer_branch
      %16 = sbr.rel target = $region3
    $region8: #{vq_ema_forward.1} parent=1 // loop_exit
      _
    %1232 = vsyncpa [#allocation3], 1
    %s1233 = scalar_lea.sflag [#allocation3], 1
    %1234 = vsyncpa %s1233, 1

</llo_original>
